<compile_context>
chip_gen: v7x
topology: tpu7x:2x2x1
jax: 0.10.0
libtpu: 0.0.40
codegen_flags: <defaults>
</compile_context>

<pallas_src>
import functools

import jax
import jax.numpy as jnp
from jax.experimental import pallas as pl
from jax.experimental.pallas import tpu as pltpu

LANE = 128


def _shortcut_kernel(x_ref, w_ref, b_ref, o_ref):
    # x_ref: (C_in, tp)  bf16 (stride>1, cast fused into the slice) or f32
    #        (stride==1: no wrapper pre-pass; cast to bf16 here).
    # w_ref: (C_out, C_in) bf16 -- conv weight with eval-mode BN scale folded in
    # b_ref: (C_out, 1)  f32    -- folded BN bias
    # o_ref: (C_out, tp) f32 (or bf16 if out_dtype=bfloat16)
    x = x_ref[...].astype(jnp.bfloat16)
    acc = jnp.dot(w_ref[...], x, preferred_element_type=jnp.float32)
    o_ref[...] = (acc + b_ref[...]).astype(o_ref.dtype)


def _vmem_budget_bytes():
    # Derive from the actual chip (64 MiB/TC on v7x, 128 MiB on v5e/v6e) and
    # leave headroom so the compiler keeps 2-deep pipelining on x/out.
    try:
        cap = pltpu.get_tpu_info().vmem_capacity_bytes
    except Exception:  # interpret mode / info unavailable
        cap = 64 * 1024 * 1024
    return int(cap * 3 // 4)


def _pick_lane_tile(lane_extent, c_in, c_out, x_bytes, out_bytes, tp_req, budget):
    """Largest lane tile (multiple of 128, <= tp_req) whose double-buffered
    working set (x tile + out tile, plus resident weight/bias) fits `budget`."""
    if lane_extent < LANE:
        return lane_extent  # toy shapes; masked stores acceptable
    tp = min(tp_req, lane_extent)
    tp = max(LANE, (tp // LANE) * LANE)
    fixed = 2 * c_out * c_in * 2 + 2 * c_out * 4          # weight(bf16)+bias(f32), 2 bufs
    per_lane = 2 * (c_in * x_bytes + c_out * out_bytes)   # double-buffered x + out
    while tp > LANE and fixed + per_lane * tp > budget:
        tp -= LANE
    return tp


def _limit_and_cost(n, c_in, c_out, p, tpl, x_bytes, out_bytes, budget):
    working = (2 * c_in * tpl * x_bytes + 2 * c_out * tpl * out_bytes
               + 2 * c_out * c_in * 2 + 2 * c_out * 4)
    vmem_limit = int(min(budget, max(4 * 1024 * 1024, 2 * working)))
    cost = pl.CostEstimate(
        flops=2 * n * p * c_in * c_out,
        transcendentals=0,
        bytes_accessed=int(n * c_in * p * x_bytes + c_out * c_in * 2
                           + c_out * 4 + n * c_out * p * out_bytes),
    )
    return vmem_limit, cost


@functools.partial(jax.jit, static_argnames=("stride", "out_dtype", "tp"))
def shortcut_conv1x1_bn(x, w_bf16, bias_f32, *, stride=1,
                        out_dtype=jnp.float32, tp=1024):
    """1x1 strided conv (bias=False) + folded eval-mode BatchNorm2d, NCHW in/out.

    x:        (N, C_in, H, W)  f32
    w_bf16:   (C_out, C_in)    bf16 -- BN scale already folded in
    bias_f32: (C_out, 1)       f32  -- folded BN bias
    Returns   (N, C_out, ceil(H/stride), ceil(W/stride)) in out_dtype.
    """
    N, C_in, H, W = x.shape
    C_out = w_bf16.shape[0]
    s = stride

    if s != 1:
        # The strided slice must materialize; fuse the bf16 cast into it.
        xs = x[:, :, ::s, ::s].astype(jnp.bfloat16)
    else:
        # No pre-pass: feed f32 straight to the kernel, cast in-kernel.
        xs = x
    Ho, Wo = xs.shape[2], xs.shape[3]
    P = Ho * Wo

    x_bytes = jnp.dtype(xs.dtype).itemsize
    out_bytes = jnp.dtype(out_dtype).itemsize
    budget = _vmem_budget_bytes()

    fold_batch = P < 4 * LANE  # small-spatial stages (7x7 / 14x14 / 16x16 ...)

    if fold_batch:
        # Fold batch into the lane axis: (C_in, N*P), padded to a multiple of
        # 128.  The transpose/pad is on a small tensor and fuses under jit;
        # it buys lane-dense unmasked stores and far fewer grid steps.
        L = N * P
        L_pad = max(LANE, ((L + LANE - 1) // LANE) * LANE)
        xf = jnp.moveaxis(xs.reshape(N, C_in, P), 0, 1).reshape(C_in, L)
        if L_pad != L:
            xf = jnp.pad(xf, ((0, 0), (0, L_pad - L)))

        tpl = _pick_lane_tile(L_pad, C_in, C_out, x_bytes, out_bytes, tp, budget)
        vmem_limit, cost = _limit_and_cost(N, C_in, C_out, P, tpl,
                                           x_bytes, out_bytes, budget)
        grid = (pl.cdiv(L_pad, tpl),)
        # NOTE(v7x): with a single tile this grid has 1 step and one TC idles;
        # fine for tiny shapes, revisit if N*P grows but stays < 512.
        out = pl.pallas_call(
            _shortcut_kernel,
            out_shape=jax.ShapeDtypeStruct((C_out, L_pad), out_dtype),
            grid=grid,
            in_specs=[
                pl.BlockSpec((C_in, tpl), lambda p: (0, p)),
                pl.BlockSpec((C_out, C_in), lambda p: (0, 0)),
                pl.BlockSpec((C_out, 1), lambda p: (0, 0)),
            ],
            out_specs=pl.BlockSpec((C_out, tpl), lambda p: (0, p)),
            compiler_params=pltpu.CompilerParams(
                dimension_semantics=("parallel",),
                vmem_limit_bytes=vmem_limit,
            ),
            cost_estimate=cost,
        )(xf, w_bf16, bias_f32)
        y = out[:, :L] if L_pad != L else out
        y = jnp.moveaxis(y.reshape(C_out, N, P), 0, 1)
        return y.reshape(N, C_out, Ho, Wo)

    # Large-spatial path: per-image layout, spatial flattened on the lane axis.
    x_flat = xs.reshape(N, C_in, P)  # free, contiguous
    tpl = _pick_lane_tile(P, C_in, C_out, x_bytes, out_bytes, tp, budget)
    vmem_limit, cost = _limit_and_cost(N, C_in, C_out, P, tpl,
                                       x_bytes, out_bytes, budget)
    grid = (N, pl.cdiv(P, tpl))
    out = pl.pallas_call(
        _shortcut_kernel,
        out_shape=jax.ShapeDtypeStruct((N, C_out, P), out_dtype),
        grid=grid,
        in_specs=[
            pl.BlockSpec((None, C_in, tpl), lambda n, p: (n, 0, p)),
            pl.BlockSpec((C_out, C_in), lambda n, p: (0, 0)),
            pl.BlockSpec((C_out, 1), lambda n, p: (0, 0)),
        ],
        out_specs=pl.BlockSpec((None, C_out, tpl), lambda n, p: (n, 0, p)),
        compiler_params=pltpu.CompilerParams(
            dimension_semantics=("parallel", "parallel"),
            vmem_limit_bytes=vmem_limit,
        ),
        cost_estimate=cost,
    )(x_flat, w_bf16, bias_f32)
    return out.reshape(N, C_out, Ho, Wo)


class ShortCutPallas:
    """resnet-like shortcut: 1x1 strided conv (no bias) + BatchNorm2d, or Identity."""

    def __init__(self, in_channels, out_channels, stride, key, eps=1e-5):
        self.in_channels = in_channels
        self.out_channels = out_channels
        self.stride = stride
        self.eps = eps
        self.is_identity = (stride == 1 and in_channels == out_channels)
        if not self.is_identity:
            k0, k1, k2, k3, k4 = jax.random.split(key, 5)
            # Conv2d weight (C_out, C_in, 1, 1) kept as (C_out, C_in).
            self.w = jax.random.normal(k0, (out_channels, in_channels), jnp.float32) * 0.1
            # BatchNorm2d params / running stats (deterministic, non-trivial).
            self.gamma = 1.0 + 0.1 * jax.random.normal(k1, (out_channels,), jnp.float32)
            self.beta = 0.1 * jax.random.normal(k2, (out_channels,), jnp.float32)
            self.running_mean = 0.1 * jax.random.normal(k3, (out_channels,), jnp.float32)
            self.running_var = 1.0 + 0.1 * jax.random.uniform(k4, (out_channels,), jnp.float32)
            # Fold eval-mode BN into the weight; hoist dtype conversions here
            # (per-call converts removed from the hot path).
            inv_std = 1.0 / jnp.sqrt(self.running_var + self.eps)
            scale = self.gamma * inv_std                                   # (C_out,)
            self.w_bf16 = (self.w * scale[:, None]).astype(jnp.bfloat16)   # (C_out, C_in)
            self.bias = (self.beta - self.running_mean * scale) \
                .reshape(out_channels, 1).astype(jnp.float32)

    def __call__(self, x):
        # x: (N, C_in, H, W) -- NCHW, like PyTorch.
        if self.is_identity:
            return x
        return shortcut_conv1x1_bn(x, self.w_bf16, self.bias,
                                   stride=self.stride, out_dtype=jnp.float32)

    def reference(self, x):
        """Plain-JAX reference (same math, all f32, explicit BN — no folding)."""
        if self.is_identity:
            return x
        s = self.stride
        xs = x[:, :, ::s, ::s]
        conv = jnp.einsum("nchw,oc->nohw", xs, self.w)     # 1x1 conv over channels
        inv_std = 1.0 / jnp.sqrt(self.running_var + self.eps)
        scale = (self.gamma * inv_std).reshape(1, -1, 1, 1)
        bias = (self.beta - self.gamma * self.running_mean * inv_std).reshape(1, -1, 1, 1)
        return conv * scale + bias


if __name__ == "__main__":
    key = jax.random.PRNGKey(0)
    kx, kp = jax.random.split(key)

    # Small shapes: batch=2, in_channels=4, out_channels=8, spatial=16.
    x = jax.random.normal(kx, (2, 4, 16, 16), jnp.float32)

    # Projection shortcut: channel change + stride 2 (fold-batch lane layout).
    m = ShortCutPallas(in_channels=4, out_channels=8, stride=2, key=kp)
    y = jax.block_until_ready(m(x))
    y_ref = m.reference(x)
    assert y.shape == (2, 8, 8, 8), y.shape
    # bf16 operands with f32 accumulation vs. a pure-f32 reference.
    assert jnp.allclose(y, y_ref, atol=2e-2, rtol=2e-2), float(jnp.max(jnp.abs(y - y_ref)))

    # Channel change, stride 1: f32 x fed straight to the kernel, cast in-kernel.
    m1 = ShortCutPallas(in_channels=4, out_channels=8, stride=1, key=kp)
    y1 = jax.block_until_ready(m1(x))
    y1_ref = m1.reference(x)
    assert y1.shape == (2, 8, 16, 16), y1.shape
    assert jnp.allclose(y1, y1_ref, atol=2e-2, rtol=2e-2), float(jnp.max(jnp.abs(y1 - y1_ref)))

    # Identity branch.
    ident = ShortCutPallas(in_channels=4, out_channels=4, stride=1, key=kp)
    yi = jax.block_until_ready(ident(x))
    assert jnp.array_equal(yi, x)

    print("KERNEL_OK")
</pallas_src>

<mosaic_0001>
module attributes {stable_mosaic.version = 11 : i64} {
  func.func @_shortcut_kernel(%arg0: i32, %arg1: memref<4x128xbf16, #tpu.memory_space<vmem>>, %arg2: memref<8x4xbf16, #tpu.memory_space<vmem>>, %arg3: memref<8x1xf32, #tpu.memory_space<vmem>>, %arg4: memref<8x128xf32, #tpu.memory_space<vmem>>) attributes {dimension_semantics = [#tpu.dimension_semantics<parallel>], iteration_bounds = array<i64: 1>, scalar_prefetch = 0 : i64, scratch_operands = 0 : i64, tpu.core_type = #tpu.core_type<tc>, window_params = [{transform_indices = @transform_0, window_bounds = array<i64: 4, 128>}, {pipeline_mode = #tpu.pipeline_mode<synchronous>, transform_indices = @transform_1, window_bounds = array<i64: 8, 4>}, {pipeline_mode = #tpu.pipeline_mode<synchronous>, transform_indices = @transform_2, window_bounds = array<i64: 8, 1>}, {transform_indices = @transform_3, window_bounds = array<i64: 8, 128>}]} {
    %c0 = arith.constant 0 : index
    %c0_0 = arith.constant 0 : index
    %0 = vector.load %arg1[%c0, %c0_0] : memref<4x128xbf16, #tpu.memory_space<vmem>>, vector<4x128xbf16>
    %c0_1 = arith.constant 0 : index
    %c0_2 = arith.constant 0 : index
    %1 = vector.load %arg2[%c0_1, %c0_2] : memref<8x4xbf16, #tpu.memory_space<vmem>>, vector<8x4xbf16>
    %cst = arith.constant dense<0.000000e+00> : vector<8x128xf32>
    %2 = tpu.matmul %1, %0, %cst {dimension_numbers = #tpu.dot_dimension_numbers<[1], [0], [0], [1], [0, 0, 1, 1], [], []>} : vector<8x4xbf16>, vector<4x128xbf16>, vector<8x128xf32> -> vector<8x128xf32>
    %c0_3 = arith.constant 0 : index
    %c0_4 = arith.constant 0 : index
    %3 = vector.load %arg3[%c0_3, %c0_4] : memref<8x1xf32, #tpu.memory_space<vmem>>, vector<8x1xf32>
    %4 = vector.broadcast %3 : vector<8x1xf32> to vector<8x128xf32>
    %5 = arith.addf %2, %4 : vector<8x128xf32>
    %c0_5 = arith.constant 0 : index
    %c0_6 = arith.constant 0 : index
    %6 = vector.load %arg4[%c0_5, %c0_6] : memref<8x128xf32, #tpu.memory_space<vmem>>, vector<8x128xf32>
    tpu.vector_store %arg4[%c0_5, %c0_6], %5 {strides = array<i32>} : memref<8x128xf32, #tpu.memory_space<vmem>>, vector<8x128xf32>,
    return
  }
  func.func @transform_0(%arg0: i32) -> (i32, i32) {
    %c0_i32 = arith.constant 0 : i32
    %c0_i32_0 = arith.constant 0 : i32
    return %c0_i32, %arg0 : i32, i32
  }
  func.func @transform_1(%arg0: i32) -> (i32, i32) {
    %c0_i32 = arith.constant 0 : i32
    %c0_i32_0 = arith.constant 0 : i32
    %c0_i32_1 = arith.constant 0 : i32
    return %c0_i32, %c0_i32_0 : i32, i32
  }
  func.func @transform_2(%arg0: i32) -> (i32, i32) {
    %c0_i32 = arith.constant 0 : i32
    %c0_i32_0 = arith.constant 0 : i32
    %c0_i32_1 = arith.constant 0 : i32
    return %c0_i32, %c0_i32_0 : i32, i32
  }
  func.func @transform_3(%arg0: i32) -> (i32, i32) {
    %c0_i32 = arith.constant 0 : i32
    %c0_i32_0 = arith.constant 0 : i32
    return %c0_i32, %arg0 : i32, i32
  }
}

</mosaic_0001>

<llo_original>
// kernel: shortcut_conv1x1_bn.1
$region0: #{shortcut_conv1x1_bn.1}
  #allocation0 [shape = 'u32[]', space=smem, size = 0x4, offset = 0x4, fixed_abs, tag = 'smem constant byte address 0x4 - core index']
  #allocation1 [shape = 'u32[144,128]{1,0:T(1,128)}', space=vmem, size = 0x12000, scoped, tag = 'internal scratch']
  %s0 = inlined_call_operand.vmem [shape: bf16[4,128], index: 0, kind: input, shape index: {}]
  %s1 = inlined_call_operand.vmem [shape: bf16[8,4], index: 1, kind: input, shape index: {}]
  %s2 = inlined_call_operand.vmem [shape: f32[8,1], index: 2, kind: input, shape index: {}]
  %s3 = inlined_call_operand.vmem [shape: f32[8,128], index: 3, kind: output, shape index: {}]
  %s4 = sld [smem:[#allocation0]]
  $region22: #{shortcut_conv1x1_bn.1} parent=0
    _
  %s6 = ssub.s32 1, %s4
  %s7 = scalar_select 0, %s6, %s4
  // Predicated region
  $region2: #{shortcut_conv1x1_bn.1} parent=0 // pred_check
    _
  $region3: #{shortcut_conv1x1_bn.1} parent=0 // pred_check_branch
    %9 = sbr.rel (0) target = $region5
  $region4: #{shortcut_conv1x1_bn.1} parent=0 // pred_region
    _
  $region5: #{shortcut_conv1x1_bn.1} parent=0 // pred_fallthru
    _
  // Predicated region
  $region6: #{shortcut_conv1x1_bn.1} parent=0 // pred_check
    _
  $region7: #{shortcut_conv1x1_bn.1} parent=0 // pred_check_branch
    %11 = sbr.rel (0) target = $region9
  $region8: #{shortcut_conv1x1_bn.1} parent=0 // pred_region
    _
  $region9: #{shortcut_conv1x1_bn.1} parent=0 // pred_fallthru
    _
  // Predicated region
  $region10: #{shortcut_conv1x1_bn.1} parent=0 // pred_check
    _
  $region11: #{shortcut_conv1x1_bn.1} parent=0 // pred_check_branch
    %13 = sbr.rel (0) target = $region13
  $region12: #{shortcut_conv1x1_bn.1} parent=0 // pred_region
    _
  $region13: #{shortcut_conv1x1_bn.1} parent=0 // pred_fallthru
    _
  %v15 = vld [vmem:[%s0] sm:$0x3]
  %v16 = vld [vmem:[%s1] sm:$0xf]
  %v17 = vld [vmem:[%s2] sm:$0xff]
  %19 = vset.pattern.permute.xlu0 0
  %20 = vperm.xlu0 %19, %v17
  %v21 = vpop.permute.xlu0 %20
  %vm23 = vcmask 31744
  %v25 = vsel %vm23, %v16, 0
  %vm27 = vcmask 1041408
  %v29 = vsel %vm27, %v15, 0
  %31 = vmatprep.subr.bf16.mxu0 0
  %32 = vmatpush1.bf16.msra.mxu0 %v29
  %33 = vmatprep.subr.bf16.mxu0 0
  %34 = vmatpush1.bf16.msra.mxu0 0
  %35 = vmatprep.subr.bf16.mxu0 0
  %36 = vmatpush1.bf16.msra.mxu0 0
  %37 = vmatprep.subr.bf16.mxu0 0
  %38 = vmatpush1.bf16.msra.mxu0 0
  %39 = vmatprep.subr.bf16.mxu0 0
  %40 = vmatpush1.bf16.msra.mxu0 0
  %41 = vmatprep.subr.bf16.mxu0 0
  %42 = vmatpush1.bf16.msra.mxu0 0
  %43 = vmatprep.subr.bf16.mxu0 0
  %44 = vmatpush1.bf16.msra.mxu0 0
  %45 = vmatprep.subr.bf16.mxu0 0
  %46 = vmatpush1.bf16.msra.mxu0 0
  %47 = vmatprep.subr.bf16.mxu0 0
  %48 = vmatpush1.bf16.msra.mxu0 0
  %49 = vmatprep.subr.bf16.mxu0 0
  %50 = vmatpush1.bf16.msra.mxu0 0
  %51 = vmatprep.subr.bf16.mxu0 0
  %52 = vmatpush1.bf16.msra.mxu0 0
  %53 = vmatprep.subr.bf16.mxu0 0
  %54 = vmatpush1.bf16.msra.mxu0 0
  %55 = vmatprep.subr.bf16.mxu0 0
  %56 = vmatpush1.bf16.msra.mxu0 0
  %57 = vmatprep.subr.bf16.mxu0 0
  %58 = vmatpush1.bf16.msra.mxu0 0
  %59 = vmatprep.subr.bf16.mxu0 0
  %60 = vmatpush1.bf16.msra.mxu0 0
  %61 = vmatprep.subr.bf16.mxu0 0
  %62 = vmatpush1.bf16.msra.mxu0 0
  %63 = vmatprep.mubr.bf16.mxu0 0
  %64 = vmatmul.mubr.bf16.gmra.mrb[0].mxu0 %v25
  %v65 = vpop.f32.mrb[0].mxu0
  %v66 = vadd.f32 %v21, %v65
  %v67 = vpop.f32.mrb[0].mxu0
  %v68 = vpop.f32.mrb[0].mxu0
  %v69 = vpop.f32.mrb[0].mxu0
  %70 = vdwg.mxu0
  %71 = vst [vmem:[%s3] sm:$0xff] %v66
  // Predicated region
  $region14: #{shortcut_conv1x1_bn.1} parent=0 // pred_check
    _
  $region15: #{shortcut_conv1x1_bn.1} parent=0 // pred_check_branch
    %73 = sbr.rel (0) target = $region17
  $region16: #{shortcut_conv1x1_bn.1} parent=0 // pred_region
    _
  $region17: #{shortcut_conv1x1_bn.1} parent=0 // pred_fallthru
    _
  // Predicated region
  $region18: #{shortcut_conv1x1_bn.1} parent=0 // pred_check
    _
  $region19: #{shortcut_conv1x1_bn.1} parent=0 // pred_check_branch
    %75 = sbr.rel (0) target = $region21
  $region20: #{shortcut_conv1x1_bn.1} parent=0 // pred_region
    _
  $region21: #{shortcut_conv1x1_bn.1} parent=0 // pred_fallthru
    _

</llo_original>
